<compile_context>
chip_gen: v5e
topology: v5e:2x2
jax: 0.10.0
libtpu: 0.0.40
codegen_flags: <defaults>
</compile_context>

<pallas_src>
import math

import jax
import jax.numpy as jnp
from jax.experimental import pallas as pl
from jax.experimental.pallas import tpu as pltpu


_SQRT_HALF = 0.7071067811865476  # 1 / sqrt(2)


def _round_up(x, m):
    return ((x + m - 1) // m) * m


def _gelu_exact(x):
    # ESM's original gelu: x * 0.5 * (1 + erf(x / sqrt(2))).
    # erf via Abramowitz & Stegun 7.1.26 (|err| <= 1.5e-7). The divide is routed to
    # the EUP reciprocal slot and exp is EUP, so the VALU epilogue stays short.
    # TODO(synk): switch to lax.erf once its Mosaic lowering is guaranteed.
    p = 0.3275911
    a1, a2, a3, a4, a5 = (0.254829592, -0.284496736, 1.421413741,
                          -1.453152027, 1.061405429)
    z = x * _SQRT_HALF
    sign = jnp.where(z >= 0.0, 1.0, -1.0)
    az = jnp.abs(z)
    t = pl.reciprocal(1.0 + p * az, approx=True)          # EUP, not a VALU divide
    poly = t * (a1 + t * (a2 + t * (a3 + t * (a4 + t * a5))))
    erf = sign * (1.0 - poly * jnp.exp(-(az * az)))        # exp on EUP
    return x * 0.5 * (1.0 + erf)


def _make_kernel(n_chunks, chunk):
    def kernel(x_ref, w_ref, b_ref, o_ref):
        # x_ref: (tm, H)   activation row tile (streamed; inner grid axis)
        # w_ref: (H, tn)   weight column panel (resident across the inner axis)
        # b_ref: (1, tn)   f32 bias panel
        # o_ref: (tm, tn)  output tile
        x = x_ref[...]
        # Sub-chunk the output columns: per-chunk dot + bias + GELU + store lets the
        # scheduler overlap the next chunk's MXU push with this chunk's VPU epilogue
        # and keeps the live f32 accumulator small.
        for c in range(n_chunks):
            sl = pl.ds(c * chunk, chunk)
            acc = jnp.dot(x, w_ref[:, sl], preferred_element_type=jnp.float32)
            acc = acc + b_ref[:, sl]
            o_ref[:, sl] = _gelu_exact(acc).astype(o_ref.dtype)
    return kernel


def esm_intermediate_forward(hidden_states, weight, bias, *, tm=512, tn=1024,
                             compute_dtype=jnp.bfloat16, out_dtype=None,
                             vmem_budget_bytes=48 * 1024 * 1024):
    """Fused dense + exact-erf GELU (EsmIntermediate forward).

    hidden_states: [..., H]; weight: [H, I] (torch nn.Linear weight transposed);
    bias: [I]. For best performance store `weight` persistently in `compute_dtype`
    (no per-call cast happens then) and pass out_dtype=jnp.bfloat16 when the
    downstream consumer accepts it (halves store bandwidth).
    """
    orig_dtype = hidden_states.dtype
    out_dtype = orig_dtype if out_dtype is None else out_dtype
    *lead, H = hidden_states.shape
    H_w, I = weight.shape
    assert H == H_w, "weight must be [hidden_size, intermediate_size]"
    M = int(math.prod(lead)) if lead else 1

    cdt_size = jnp.dtype(compute_dtype).itemsize
    out_size = jnp.dtype(out_dtype).itemsize
    pack = 8 * max(1, 4 // cdt_size)          # sublane packing: 16 for bf16, 8 for f32

    x2d = hidden_states.reshape(M, H)

    # --- tile sizes -----------------------------------------------------------
    # Row tile: large (compute-bound on v6e/v7x) unless the problem is small.
    tm_eff = min(tm, _round_up(M, pack))

    # Column (intermediate) tile: pad I up to a 128-multiple, then pick the largest
    # 128-multiple candidate that divides it (lane-dense stores, bounded panel).
    I_pad = _round_up(I, 128)
    tn_eff = 128
    for cand in (tn, 1024, 512, 256, 128):
        if cand <= I_pad and I_pad % cand == 0:
            tn_eff = cand
            break

    # VMEM guard (v7x has only 64 MiB physical): double-buffered working set must
    # fit the budget; shrink tn then tm if an unusually large H would overflow.
    def _working_set(tn_c, tm_c):
        return 2 * (H * tn_c * cdt_size          # weight panel
                    + tm_c * H * cdt_size        # activation tile
                    + tn_c * 4                   # bias
                    + tm_c * tn_c * out_size)    # output tile
    while tn_eff > 128 and _working_set(tn_eff, tm_eff) > vmem_budget_bytes:
        tn_eff //= 2
    while tm_eff > pack and _working_set(tn_eff, tm_eff) > vmem_budget_bytes:
        tm_eff = max(pack, _round_up(tm_eff // 2, pack))

    M_pad = _round_up(M, tm_eff)

    # --- padding / dtype plumbing (no-ops when caller already provides them) ----
    if M_pad != M:
        x2d = jnp.pad(x2d, ((0, M_pad - M), (0, 0)))
    if x2d.dtype != compute_dtype:
        x2d = x2d.astype(compute_dtype)

    w = weight if weight.dtype == compute_dtype else weight.astype(compute_dtype)
    b2d = bias.reshape(1, I)
    if b2d.dtype != jnp.float32:
        b2d = b2d.astype(jnp.float32)
    if I_pad != I:
        w = jnp.pad(w, ((0, 0), (0, I_pad - I)))
        b2d = jnp.pad(b2d, ((0, 0), (0, I_pad - I)))

    # In-kernel column sub-chunking (128-multiple chunks).
    n_chunks = 1
    for c in (4, 2):
        if tn_eff % (c * 128) == 0:
            n_chunks = c
            break
    chunk = tn_eff // n_chunks

    num_j = I_pad // tn_eff
    num_i = M_pad // tm_eff
    # Weight-column axis OUTER (panel resident), row axis INNER (streamed).
    grid = (num_j, num_i)

    cost = pl.CostEstimate(
        flops=2 * M_pad * H * I_pad,
        transcendentals=2 * M_pad * I_pad,                      # exp + reciprocal
        bytes_accessed=(num_j * M_pad * H * cdt_size            # activations re-streamed per panel
                        + H * I_pad * cdt_size                  # each weight panel read once
                        + I_pad * 4                             # bias (f32)
                        + M_pad * I_pad * out_size),            # output
    )

    out2d = pl.pallas_call(
        _make_kernel(n_chunks, chunk),
        out_shape=jax.ShapeDtypeStruct((M_pad, I_pad), out_dtype),
        grid_spec=pltpu.PrefetchScalarGridSpec(
            num_scalar_prefetch=0,
            grid=grid,
            in_specs=[
                pl.BlockSpec((tm_eff, H), lambda j, i: (i, 0)),    # streamed activation rows
                pl.BlockSpec((H, tn_eff), lambda j, i: (0, j)),    # resident weight panel
                pl.BlockSpec((1, tn_eff), lambda j, i: (0, j)),    # bias panel
            ],
            out_specs=pl.BlockSpec((tm_eff, tn_eff), lambda j, i: (i, j)),
        ),
        compiler_params=pltpu.CompilerParams(
            dimension_semantics=("parallel", "parallel"),   # no reduction axis
            vmem_limit_bytes=vmem_budget_bytes,             # safe on v7x (64 MiB physical)
        ),
        cost_estimate=cost,
    )(x2d, w, b2d)

    out2d = out2d[:M, :I]
    return out2d.reshape(*lead, I)


if __name__ == "__main__":
    # Small synthetic config: hidden_size=32, intermediate_size=64
    B, S = 2, 8
    HIDDEN, INTERMEDIATE = 32, 64

    key = jax.random.PRNGKey(0)
    k1, k2, k3 = jax.random.split(key, 3)

    hidden_states = jax.random.normal(k1, (B, S, HIDDEN), dtype=jnp.float32)
    # Deterministic "Linear" params (weight stored as [H, I] = torch_weight.T).
    weight_f32 = jax.random.normal(k2, (HIDDEN, INTERMEDIATE), dtype=jnp.float32) * 0.02
    bias = jax.random.normal(k3, (INTERMEDIATE,), dtype=jnp.float32) * 0.02

    # Store the weight persistently in bf16 (one-time conversion, no per-call cast).
    weight_bf16 = weight_f32.astype(jnp.bfloat16)

    out = esm_intermediate_forward(hidden_states, weight_bf16, bias)
    out = jax.block_until_ready(out)

    # Reference with matching numerics (bf16 operands, f32 accumulation, exact erf gelu).
    x2d = hidden_states.reshape(-1, HIDDEN).astype(jnp.bfloat16)
    acc = jnp.dot(x2d, weight_bf16, preferred_element_type=jnp.float32) + bias
    ref = acc * 0.5 * (1.0 + jax.scipy.special.erf(acc * _SQRT_HALF))
    ref = ref.reshape(B, S, INTERMEDIATE)
    assert out.shape == ref.shape
    assert jnp.allclose(out, ref, atol=2e-3, rtol=2e-2), "mismatch vs bf16 reference"

    # Loose sanity check vs. the pure-f32 reference (kernel computes in bf16).
    acc32 = hidden_states.reshape(-1, HIDDEN) @ weight_f32 + bias
    ref32 = acc32 * 0.5 * (1.0 + jax.scipy.special.erf(acc32 * _SQRT_HALF))
    assert jnp.allclose(out, ref32.reshape(B, S, INTERMEDIATE), atol=2e-2, rtol=5e-2), \
        "mismatch vs f32 reference"

    print("KERNEL_OK")
</pallas_src>

<mosaic_0001>
module attributes {stable_mosaic.version = 11 : i64} {
  func.func @kernel(%arg0: i32, %arg1: i32, %arg2: memref<16x32xbf16, #tpu.memory_space<vmem>>, %arg3: memref<32x128xbf16, #tpu.memory_space<vmem>>, %arg4: memref<1x128xf32, #tpu.memory_space<vmem>>, %arg5: memref<16x128xf32, #tpu.memory_space<vmem>>) attributes {dimension_semantics = [#tpu.dimension_semantics<parallel>, #tpu.dimension_semantics<parallel>], iteration_bounds = array<i64: 1, 1>, scalar_prefetch = 0 : i64, scratch_operands = 0 : i64, tpu.core_type = #tpu.core_type<tc>, window_params = [{transform_indices = @transform_0, window_bounds = array<i64: 16, 32>}, {transform_indices = @transform_1, window_bounds = array<i64: 32, 128>}, {transform_indices = @transform_2, window_bounds = array<i64: 1, 128>}, {transform_indices = @transform_3, window_bounds = array<i64: 16, 128>}]} {
    %c0 = arith.constant 0 : index
    %c0_0 = arith.constant 0 : index
    %0 = vector.load %arg2[%c0, %c0_0] : memref<16x32xbf16, #tpu.memory_space<vmem>>, vector<16x32xbf16>
    %c0_1 = arith.constant 0 : index
    %c0_2 = arith.constant 0 : index
    %1 = vector.load %arg3[%c0_1, %c0_2] : memref<32x128xbf16, #tpu.memory_space<vmem>>, vector<32x128xbf16>
    %cst = arith.constant dense<0.000000e+00> : vector<16x128xf32>
    %2 = tpu.matmul %0, %1, %cst {dimension_numbers = #tpu.dot_dimension_numbers<[1], [0], [0], [1], [0, 0, 1, 1], [], []>} : vector<16x32xbf16>, vector<32x128xbf16>, vector<16x128xf32> -> vector<16x128xf32>
    %c0_3 = arith.constant 0 : index
    %c0_4 = arith.constant 0 : index
    %3 = vector.load %arg4[%c0_3, %c0_4] : memref<1x128xf32, #tpu.memory_space<vmem>>, vector<1x128xf32>
    %4 = vector.broadcast %3 : vector<1x128xf32> to vector<16x128xf32>
    %5 = arith.addf %2, %4 : vector<16x128xf32>
    %cst_5 = arith.constant 0.707106769 : f32
    %6 = vector.broadcast %cst_5 : f32 to vector<16x128xf32>
    %7 = arith.mulf %5, %6 : vector<16x128xf32>
    %cst_6 = arith.constant 0.000000e+00 : f32
    %8 = vector.broadcast %cst_6 : f32 to vector<16x128xf32>
    %9 = arith.cmpf oge, %7, %8 : vector<16x128xf32>
    %cst_7 = arith.constant 1.000000e+00 : f32
    %cst_8 = arith.constant -1.000000e+00 : f32
    %10 = vector.broadcast %cst_7 : f32 to vector<16x128xf32>
    %11 = vector.broadcast %cst_8 : f32 to vector<16x128xf32>
    %12 = arith.select %9, %10, %11 : vector<16x128xi1>, vector<16x128xf32>
    %13 = math.absf %7 : vector<16x128xf32>
    %cst_9 = arith.constant 0.327591091 : f32
    %14 = vector.broadcast %cst_9 : f32 to vector<16x128xf32>
    %15 = arith.mulf %14, %13 : vector<16x128xf32>
    %cst_10 = arith.constant 1.000000e+00 : f32
    %16 = vector.broadcast %cst_10 : f32 to vector<16x128xf32>
    %17 = arith.addf %16, %15 : vector<16x128xf32>
    %18 = tpu.reciprocal %17 {approx = true} : vector<16x128xf32> -> vector<16x128xf32>
    %cst_11 = arith.constant 1.06140542 : f32
    %19 = vector.broadcast %cst_11 : f32 to vector<16x128xf32>
    %20 = arith.mulf %18, %19 : vector<16x128xf32>
    %cst_12 = arith.constant -1.45315206 : f32
    %21 = vector.broadcast %cst_12 : f32 to vector<16x128xf32>
    %22 = arith.addf %21, %20 : vector<16x128xf32>
    %23 = arith.mulf %18, %22 : vector<16x128xf32>
    %cst_13 = arith.constant 1.42141378 : f32
    %24 = vector.broadcast %cst_13 : f32 to vector<16x128xf32>
    %25 = arith.addf %24, %23 : vector<16x128xf32>
    %26 = arith.mulf %18, %25 : vector<16x128xf32>
    %cst_14 = arith.constant -0.284496725 : f32
    %27 = vector.broadcast %cst_14 : f32 to vector<16x128xf32>
    %28 = arith.addf %27, %26 : vector<16x128xf32>
    %29 = arith.mulf %18, %28 : vector<16x128xf32>
    %cst_15 = arith.constant 0.254829586 : f32
    %30 = vector.broadcast %cst_15 : f32 to vector<16x128xf32>
    %31 = arith.addf %30, %29 : vector<16x128xf32>
    %32 = arith.mulf %18, %31 : vector<16x128xf32>
    %33 = arith.mulf %13, %13 : vector<16x128xf32>
    %cst_16 = arith.constant 0.000000e+00 : f32
    %34 = vector.broadcast %cst_16 : f32 to vector<16x128xf32>
    %35 = arith.subf %34, %33 : vector<16x128xf32>
    %36 = math.exp %35 : vector<16x128xf32>
    %37 = arith.mulf %32, %36 : vector<16x128xf32>
    %cst_17 = arith.constant 1.000000e+00 : f32
    %38 = vector.broadcast %cst_17 : f32 to vector<16x128xf32>
    %39 = arith.subf %38, %37 : vector<16x128xf32>
    %40 = arith.mulf %12, %39 : vector<16x128xf32>
    %cst_18 = arith.constant 5.000000e-01 : f32
    %41 = vector.broadcast %cst_18 : f32 to vector<16x128xf32>
    %42 = arith.mulf %5, %41 : vector<16x128xf32>
    %cst_19 = arith.constant 1.000000e+00 : f32
    %43 = vector.broadcast %cst_19 : f32 to vector<16x128xf32>
    %44 = arith.addf %43, %40 : vector<16x128xf32>
    %45 = arith.mulf %42, %44 : vector<16x128xf32>
    %c0_20 = arith.constant 0 : index
    %c0_21 = arith.constant 0 : index
    %46 = vector.load %arg5[%c0_20, %c0_21] : memref<16x128xf32, #tpu.memory_space<vmem>>, vector<16x128xf32>
    tpu.vector_store %arg5[%c0_20, %c0_21], %45 {strides = array<i32>} : memref<16x128xf32, #tpu.memory_space<vmem>>, vector<16x128xf32>,
    return
  }
  func.func @transform_0(%arg0: i32, %arg1: i32) -> (i32, i32) {
    %c0_i32 = arith.constant 0 : i32
    %c0_i32_0 = arith.constant 0 : i32
    return %arg1, %c0_i32 : i32, i32
  }
  func.func @transform_1(%arg0: i32, %arg1: i32) -> (i32, i32) {
    %c0_i32 = arith.constant 0 : i32
    %c0_i32_0 = arith.constant 0 : i32
    return %c0_i32, %arg0 : i32, i32
  }
  func.func @transform_2(%arg0: i32, %arg1: i32) -> (i32, i32) {
    %c0_i32 = arith.constant 0 : i32
    %c0_i32_0 = arith.constant 0 : i32
    return %c0_i32, %arg0 : i32, i32
  }
  func.func @transform_3(%arg0: i32, %arg1: i32) -> (i32, i32) {
    %c0_i32 = arith.constant 0 : i32
    return %arg1, %arg0 : i32, i32
  }
}

</mosaic_0001>

<llo_original>
// kernel: tpu_custom_call.1
$region0: #{tpu_custom_call.1}
  #allocation0 [shape = 'u32[]', space=smem, size = 0x4, offset = 0x4, fixed_abs, tag = 'smem constant byte address 0x4 - core index']
  #allocation1 [shape = 'u32[72,128]{1,0:T(1,128)}', space=vmem, size = 0x9000, scoped, tag = 'internal scratch']
  %s0 = inlined_call_operand.hbm [shape: bf16[16,32], index: 0, kind: input, shape index: {}]
  %s1 = inlined_call_operand.hbm [shape: bf16[32,128], index: 1, kind: input, shape index: {}]
  %s2 = inlined_call_operand.vmem [shape: f32[1,128], index: 2, kind: input, shape index: {}]
  %s3 = inlined_call_operand.hbm [shape: f32[16,128], index: 3, kind: output, shape index: {}]
  %s4 = sld [smem:[#allocation0]]
  $region30: #{tpu_custom_call.1} parent=0
    _
  %s6 = ssub.s32 1, %s4
  %s7 = scalar_select 0, %s6, %s4
  $region1: #{tpu_custom_call.1} parent=0
    #allocation2 [shape = 'u8[4096]{0}', space=vmem, size = 0x1000, scoped, tag = 'input window, operand 0, single buffered']
    #allocation3 [shape = 's32[1]{0}', space=sflag, size = 0x4, scoped, tag = 'scoped memory for tpu_custom_call.1']
    #allocation4 [shape = 's32[1]{0}', space=sflag, size = 0x4, scoped, tag = 'scoped memory for tpu_custom_call.1']
    #allocation5 [shape = 'u8[8192]{0}', space=vmem, size = 0x2000, scoped, tag = 'input window, operand 1, single buffered']
    #allocation6 [shape = 's32[1]{0}', space=sflag, size = 0x4, scoped, tag = 'scoped memory for tpu_custom_call.1']
    #allocation7 [shape = 'u8[8192]{0}', space=vmem, size = 0x2000, scoped, tag = 'output window, operand 0, single buffered']
    %8 = vsyncpa [#allocation3], 0
    %9 = vsyncpa [#allocation6], 0
    %10 = vsyncpa [#allocation4], 0
    // Predicated region
    $region2: #{tpu_custom_call.1} parent=1 // pred_check
      _
    $region3: #{tpu_custom_call.1} parent=1 // pred_check_branch
      %12 = sbr.rel (0) target = $region5
    $region4: #{tpu_custom_call.1} parent=1 // pred_region
      %14 = vsyncadd [#allocation3], 0
      %s15 = sshll.u32 %s0, 4
      %s16 = int_to_ptr.hbm [resolvable:$true] %s15
      %s17 = sshll.u32 [#allocation2], 4
      %s18 = int_to_ptr.vmem [resolvable:$true] %s17
      %23 = dma.hbm_to_vmem [thread:$0]  %s16, 128, %s18, [#allocation3], 64, 64, 4
    $region5: #{tpu_custom_call.1} parent=1 // pred_fallthru
      _
    // Predicated region
    $region6: #{tpu_custom_call.1} parent=1 // pred_check
      _
    $region7: #{tpu_custom_call.1} parent=1 // pred_check_branch
      %25 = sbr.rel (0) target = $region9
    $region8: #{tpu_custom_call.1} parent=1 // pred_region
      %27 = vsyncadd [#allocation6], 0
      %s28 = sshll.u32 %s1, 4
      %s29 = int_to_ptr.hbm [resolvable:$true] %s28
      %s30 = sshll.u32 [#allocation5], 4
      %s31 = int_to_ptr.vmem [resolvable:$true] %s30
      %36 = dma.hbm_to_vmem [thread:$0]  %s29, 256, %s31, [#allocation6], 64, 64, 4
    $region9: #{tpu_custom_call.1} parent=1 // pred_fallthru
      _
    // Predicated region
    $region10: #{tpu_custom_call.1} parent=1 // pred_check
      _
    $region11: #{tpu_custom_call.1} parent=1 // pred_check_branch
      %38 = sbr.rel (0) target = $region13
    $region12: #{tpu_custom_call.1} parent=1 // pred_region
      _
    $region13: #{tpu_custom_call.1} parent=1 // pred_fallthru
      _
    // Predicated region
    $region14: #{tpu_custom_call.1} parent=1 // pred_check
      _
    $region15: #{tpu_custom_call.1} parent=1 // pred_check_branch
      %40 = sbr.rel (0) target = $region17
    $region16: #{tpu_custom_call.1} parent=1 // pred_region
      %42 = dma.done [#allocation3], 128
    $region17: #{tpu_custom_call.1} parent=1 // pred_fallthru
      _
    // Predicated region
    $region18: #{tpu_custom_call.1} parent=1 // pred_check
      _
    $region19: #{tpu_custom_call.1} parent=1 // pred_check_branch
      %44 = sbr.rel (0) target = $region21
    $region20: #{tpu_custom_call.1} parent=1 // pred_region
      %46 = dma.done [#allocation6], 256
    $region21: #{tpu_custom_call.1} parent=1 // pred_fallthru
      _
    %v48 = vld [vmem:[#allocation2] sm:$0xf]
    %v49 = vld [vmem:[#allocation2 + $0x4] sm:$0xf]
    %v50 = vld [vmem:[#allocation5] sm:$0xf]
    %v51 = vld [vmem:[#allocation5 + $0x4] sm:$0xf]
    %v52 = vld [vmem:[#allocation5 + $0x8] sm:$0xf]
    %v53 = vld [vmem:[#allocation5 + $0xc] sm:$0xf]
    %v54 = vld [vmem:[%s2] sm:$0x1]
    %v56 = vperm.slane %v54, 0
    %v60 = vunpack.c.l.b16 %v48
    %v61 = vunpack.c.l.b16 %v49
    %v62 = vpack.c.b16 %v61, %v60
    %v67 = vunpack.c.l.b16 %v50
    %v68 = vunpack.c.l.b16 %v51
    %v69 = vunpack.c.l.b16 %v52
    %v70 = vunpack.c.l.b16 %v53
    %v71 = vpack.c.b16 %v68, %v67
    %v72 = vpack.c.b16 %v70, %v69
    %vm75 = vcmask 261120
    %v77 = vsel %vm75, %v62, 0
    %79 = vmatpush.bf16.msra.mxu0 0
    %80 = vmatpush.bf16.msra.mxu0 0
    %81 = vmatpush.bf16.msra.mxu0 0
    %82 = vmatpush.bf16.msra.mxu0 0
    %83 = vmatpush.bf16.msra.mxu0 0
    %84 = vmatpush.bf16.msra.mxu0 0
    %85 = vmatpush.bf16.msra.mxu0 %v72
    %86 = vmatpush.bf16.msra.mxu0 %v71
    %87 = vmatmul.bf16.gmra.mxu0 %v77
    %v88 = vpop.f32.mrf.mxu0
    %v89 = vadd.f32 %v56, %v88
    %v90 = vpop.f32.mrf.mxu0
    %v91 = vadd.f32 %v56, %v90
    %92 = vdwg.mxu0
    %v93 = vmul.f32 %v89, 0.70710677
    %v94 = vmul.f32 %v91, 0.70710677
    %vm95 = vcmp.ge.f32.partialorder %v93, 0.0
    %vm96 = vcmp.ge.f32.partialorder %v94, 0.0
    %v97 = vsel %vm95, 1.0, -1.0
    %v98 = vsel %vm96, 1.0, -1.0
    %v99 = vand.u32 2147483647, %v93
    %v100 = vand.u32 2147483647, %v94
    %v101 = vmul.f32 %v99, 0.3275911
    %v102 = vmul.f32 %v100, 0.3275911
    %v103 = vadd.f32 %v101, 1.0
    %v104 = vadd.f32 %v102, 1.0
    %v105 = vrcp.pop %v103
    %v106 = vrcp.pop %v104
    %v107 = vmul.f32 %v105, 1.0614054
    %v108 = vmul.f32 %v106, 1.0614054
    %v109 = vadd.f32 %v107, -1.4531521
    %v110 = vadd.f32 %v108, -1.4531521
    %v111 = vmul.f32 %v105, %v109
    %v112 = vmul.f32 %v106, %v110
    %v113 = vadd.f32 %v111, 1.4214138
    %v114 = vadd.f32 %v112, 1.4214138
    %v115 = vmul.f32 %v105, %v113
    %v116 = vmul.f32 %v106, %v114
    %v117 = vadd.f32 %v115, -0.28449672
    %v118 = vadd.f32 %v116, -0.28449672
    %v119 = vmul.f32 %v105, %v117
    %v120 = vmul.f32 %v106, %v118
    %v121 = vadd.f32 %v119, 0.2548296
    %v122 = vadd.f32 %v120, 0.2548296
    %v123 = vmul.f32 %v105, %v121
    %v124 = vmul.f32 %v106, %v122
    %v125 = vmul.f32 %v99, %v99
    %v126 = vmul.f32 %v100, %v100
    %v127 = vsub.f32 0.0, %v125
    %v128 = vsub.f32 0.0, %v126
    %v129 = vmul.f32 %v127, 1.442695
    %v130 = vpow.pop %v129
    %v131 = vmul.f32 %v128, 1.442695
    %v132 = vpow.pop %v131
    %v133 = vmul.f32 %v123, %v130
    %v134 = vmul.f32 %v124, %v132
    %v135 = vsub.f32 1.0, %v133
    %v136 = vsub.f32 1.0, %v134
    %v137 = vmul.f32 %v97, %v135
    %v138 = vmul.f32 %v98, %v136
    %v139 = vmul.f32 %v89, 0.5
    %v140 = vmul.f32 %v91, 0.5
    %v141 = vadd.f32 %v137, 1.0
    %v142 = vadd.f32 %v138, 1.0
    %v143 = vmul.f32 %v139, %v141
    %v144 = vmul.f32 %v140, %v142
    %145 = vst [vmem:[#allocation7] sm:$0xff] %v143
    %146 = vst [vmem:[#allocation7 + $0x8] sm:$0xff] %v144
    // Predicated region
    $region22: #{tpu_custom_call.1} parent=1 // pred_check
      _
    $region23: #{tpu_custom_call.1} parent=1 // pred_check_branch
      %148 = sbr.rel (0) target = $region25
    $region24: #{tpu_custom_call.1} parent=1 // pred_region
      %150 = vsyncadd [#allocation4], 0
      %s151 = sshll.u32 [#allocation7], 4
      %s152 = int_to_ptr.vmem [resolvable:$true] %s151
      %s153 = sshll.u32 %s3, 4
      %s154 = int_to_ptr.hbm [resolvable:$true] %s153
      %159 = dma.vmem_to_hbm [thread:$0]  %s152, 256, %s154, [#allocation4], 128, 128, 8
    $region25: #{tpu_custom_call.1} parent=1 // pred_fallthru
      _
    // Predicated region
    $region26: #{tpu_custom_call.1} parent=1 // pred_check
      _
    $region27: #{tpu_custom_call.1} parent=1 // pred_check_branch
      %161 = sbr.rel (0) target = $region29
    $region28: #{tpu_custom_call.1} parent=1 // pred_region
      %163 = dma.done [#allocation4], 256
    $region29: #{tpu_custom_call.1} parent=1 // pred_fallthru
      _
    %164 = vsyncpa [#allocation3], 1
    %165 = vsyncpa [#allocation6], 1
    %166 = vsyncpa [#allocation4], 1

</llo_original>
